<compile_context>
chip_gen: v5e
topology: v5e:2x2
jax: 0.10.0
libtpu: 0.0.40
codegen_flags: <defaults>
</compile_context>

<pallas_src>
import jax
import jax.numpy as jnp
from jax.experimental import pallas as pl
from jax.experimental.pallas import tpu as pltpu


# ---------------------------------------------------------------------------
# Pallas kernel: one batch tile per grid step.
#   conv-as-matmul (bf16 MXU operands, f32 acc) + bias + ReLU
#   -> global mean pool via reshape + sublane reduce (1/HW applied in f32)
#   -> batched linear classifier (bf16 operands, f32 acc)
#   -> one lane-dense (BT, NCLSp=128) output block
# ---------------------------------------------------------------------------
def _miro_forward_kernel(patches_ref, wconv_ref, bconv_ref,
                         wcls_ref, bcls_ref, out_ref):
    bt = out_ref.shape[0]
    m, fp = patches_ref.shape[0], wconv_ref.shape[1]
    hw = m // bt

    # conv as one big matmul: (BT*HW, CK) @ (CK, Fp), bf16 in, f32 out.
    # CK is the true (unpadded) width; Mosaic pads lanes in VMEM only.
    h = jnp.dot(patches_ref[...], wconv_ref[...],
                preferred_element_type=jnp.float32)            # (BT*HW, Fp)
    h = jnp.maximum(h + bconv_ref[...], 0.0)                   # bias + ReLU (VPU)

    # global average pool over spatial positions for every image in the tile:
    # split the M dim (tile-boundary-preserving reshape) and reduce sublanes.
    pooled = jnp.sum(h.reshape(bt, hw, fp), axis=1) * (1.0 / hw)   # (BT, Fp) f32

    # linear classifier, once per batch tile (bf16 operands, f32 acc)
    logits = jnp.dot(pooled.astype(jnp.bfloat16), wcls_ref[...],
                     preferred_element_type=jnp.float32) + bcls_ref[...]

    # lane-dense full-block store (padded NCLSp = 128 lanes)
    out_ref[...] = logits.astype(out_ref.dtype)                # (BT, NCLSp)


def _round_up(n, m):
    return ((n + m - 1) // m) * m


# Conservative per-tile VMEM budget used to size BT; safe on v5e/v6e/v7x.
_VMEM_TILE_BUDGET = 24 * (1 << 20)


def _per_image_vmem_bytes(HW, CK, Fp, NCLSp):
    return (2 * HW * CK * 2        # double-buffered bf16 patches tile
            + 2 * HW * Fp * 4      # f32 conv activation (+ one temporary)
            + 2 * NCLSp * 4)       # double-buffered f32 logits block


def _choose_batch_tile(B, HW, CK, Fp, NCLSp):
    """Pick (BT, B_pad): BT from the VMEM budget; >=2 tiles for megacore."""
    per_image = _per_image_vmem_bytes(HW, CK, Fp, NCLSp)
    cap = max(8, min(128, (_VMEM_TILE_BUDGET // per_image) // 8 * 8))
    if B <= 8:
        # Tiny batch: one full-array tile.  Padding up to 2x8 images just to
        # occupy the second v7x TensorCore would add more padded work than
        # it parallelizes away.
        return B, B
    # At least two tiles (both TensorCores on v7x), at most `cap` images each;
    # BT a multiple of 8 keeps every block sublane-aligned.
    bt = min(cap, _round_up((B + 1) // 2, 8))
    return bt, _round_up(B, bt)


def miro_forward(x_nchw, w_conv, b_conv, w_cls, b_cls):
    """ModifiedMIRO.predict(x): logits of shape (B, num_classes)."""
    B, C, H, W = x_nchw.shape
    K = 3
    CK = K * K * C
    HW = H * W
    F = w_conv.shape[1]
    NCLS = w_cls.shape[1]

    # lane-aligned padded sizes for the weight lane dims / output lanes only
    # (the CK contraction dim is deliberately NOT padded in HBM).
    Fp = _round_up(F, 128)
    NCLSp = _round_up(NCLS, 128)

    BT, B_pad = _choose_batch_tile(B, HW, CK, Fp, NCLSp)
    n_tiles = B_pad // BT

    # --- glue: NCHW -> NHWC (bf16), im2col (3x3, pad=1, stride=1) ----------
    # Everything stays bf16 so no f32 patches intermediate is materialized.
    x = jnp.transpose(x_nchw, (0, 2, 3, 1)).astype(jnp.bfloat16)   # (B,H,W,C)
    xp = jnp.pad(x, ((0, 0), (1, 1), (1, 1), (0, 0)))
    cols = []
    for di in range(K):
        for dj in range(K):
            cols.append(xp[:, di:di + H, dj:dj + W, :])            # (B,H,W,C)
    patches = jnp.stack(cols, axis=3).reshape(B, HW, CK)           # (B,HW,CK)
    if B_pad != B:
        patches = jnp.pad(patches, ((0, B_pad - B), (0, 0), (0, 0)))
    patches = patches.reshape(B_pad * HW, CK)                      # bf16, CK unpadded

    # padded parameters (bf16 MXU operands; biases stay f32)
    w_conv_p = jnp.pad(w_conv, ((0, 0), (0, Fp - F))).astype(jnp.bfloat16)
    b_conv_p = jnp.pad(b_conv, ((0, 0), (0, Fp - F))).astype(jnp.float32)
    w_cls_p = jnp.pad(w_cls, ((0, Fp - F), (0, NCLSp - NCLS))).astype(jnp.bfloat16)
    b_cls_p = jnp.pad(b_cls, ((0, 0), (0, NCLSp - NCLS))).astype(jnp.float32)

    # VMEM sizing: estimate usage for this BT and raise the scoped limit with
    # headroom (clamped to 56 MiB so it stays under v7x's 64 MiB physical).
    est_bytes = (BT * _per_image_vmem_bytes(HW, CK, Fp, NCLSp)
                 + 2 * (CK * Fp * 2 + Fp * NCLSp * 2 + Fp * 4 + NCLSp * 4))
    vmem_limit = int(min(56 * (1 << 20),
                         max(32 * (1 << 20), est_bytes + 16 * (1 << 20))))

    grid_spec = pltpu.PrefetchScalarGridSpec(
        num_scalar_prefetch=0,
        grid=(n_tiles,),
        in_specs=[
            # patches tile: last dim == full array dim (36), so no HBM padding
            pl.BlockSpec((BT * HW, CK), lambda i: (i, 0)),
            pl.BlockSpec((CK, Fp), lambda i: (0, 0)),      # conv weight (bf16)
            pl.BlockSpec((1, Fp), lambda i: (0, 0)),       # conv bias (f32)
            pl.BlockSpec((Fp, NCLSp), lambda i: (0, 0)),   # cls weight (bf16)
            pl.BlockSpec((1, NCLSp), lambda i: (0, 0)),    # cls bias (f32)
        ],
        # each grid step owns its own output block -> non-resident, so the
        # batch-tile axis can be 'parallel' (2 TensorCores on v7x).
        out_specs=pl.BlockSpec((BT, NCLSp), lambda i: (i, 0)),
    )

    out = pl.pallas_call(
        _miro_forward_kernel,
        out_shape=jax.ShapeDtypeStruct((B_pad, NCLSp), jnp.float32),
        grid_spec=grid_spec,
        compiler_params=pltpu.CompilerParams(
            dimension_semantics=("parallel",),
            vmem_limit_bytes=vmem_limit),
    )(patches, w_conv_p, b_conv_p, w_cls_p, b_cls_p)

    # strip batch / class padding
    return out[:B, :NCLS]


# ---------------------------------------------------------------------------
# Pure-JAX reference (f32) for a correctness sanity check
# ---------------------------------------------------------------------------
def miro_forward_ref(x_nchw, w_conv, b_conv, w_cls, b_cls):
    B, C, H, W = x_nchw.shape
    K = 3
    x = jnp.transpose(x_nchw, (0, 2, 3, 1))
    xp = jnp.pad(x, ((0, 0), (1, 1), (1, 1), (0, 0)))
    cols = []
    for di in range(K):
        for dj in range(K):
            cols.append(xp[:, di:di + H, dj:dj + W, :])
    patches = jnp.stack(cols, axis=3).reshape(B, H * W, K * K * C)
    h = jnp.maximum(jnp.einsum('bpk,kf->bpf', patches, w_conv) + b_conv, 0.0)
    pooled = jnp.mean(h, axis=1)                               # (B, F)
    return pooled @ w_cls + b_cls


if __name__ == "__main__":
    # Small shapes consistent with the module: image input, conv featurizer,
    # linear classifier on top.
    B, C, H, W = 2, 4, 16, 16       # input_shape = (4, 16, 16)
    HIDDEN = 32                     # featurizer.n_outputs (stand-in)
    NUM_CLASSES = 8
    K = 3
    CK = K * K * C

    key = jax.random.PRNGKey(0)
    kx, kw1, kb1, kw2, kb2 = jax.random.split(key, 5)

    x = jax.random.normal(kx, (B, C, H, W), dtype=jnp.float32)
    # deterministic synthetic parameters (no checkpoint load)
    w_conv = 0.05 * jax.random.normal(kw1, (CK, HIDDEN), dtype=jnp.float32)
    b_conv = 0.01 * jax.random.normal(kb1, (1, HIDDEN), dtype=jnp.float32)
    w_cls = 0.05 * jax.random.normal(kw2, (HIDDEN, NUM_CLASSES), dtype=jnp.float32)
    b_cls = 0.01 * jax.random.normal(kb2, (1, NUM_CLASSES), dtype=jnp.float32)

    logits = miro_forward(x, w_conv, b_conv, w_cls, b_cls)
    jax.block_until_ready(logits)

    ref = miro_forward_ref(x, w_conv, b_conv, w_cls, b_cls)
    assert logits.shape == (B, NUM_CLASSES)
    # kernel runs its matmuls with bf16 operands (f32 accumulation), so
    # compare against the f32 reference with a bf16-level tolerance.
    assert jnp.allclose(logits, ref, atol=2e-2, rtol=2e-2), "mismatch vs reference"

    print("KERNEL_OK")
</pallas_src>

<mosaic_0001>
module attributes {stable_mosaic.version = 11 : i64} {
  func.func @_miro_forward_kernel(%arg0: i32, %arg1: memref<512x36xbf16, #tpu.memory_space<vmem>>, %arg2: memref<36x128xbf16, #tpu.memory_space<vmem>>, %arg3: memref<1x128xf32, #tpu.memory_space<vmem>>, %arg4: memref<128x128xbf16, #tpu.memory_space<vmem>>, %arg5: memref<1x128xf32, #tpu.memory_space<vmem>>, %arg6: memref<2x128xf32, #tpu.memory_space<vmem>>) attributes {dimension_semantics = [#tpu.dimension_semantics<parallel>], iteration_bounds = array<i64: 1>, scalar_prefetch = 0 : i64, scratch_operands = 0 : i64, tpu.core_type = #tpu.core_type<tc>, window_params = [{transform_indices = @transform_0, window_bounds = array<i64: 512, 36>}, {pipeline_mode = #tpu.pipeline_mode<synchronous>, transform_indices = @transform_1, window_bounds = array<i64: 36, 128>}, {pipeline_mode = #tpu.pipeline_mode<synchronous>, transform_indices = @transform_2, window_bounds = array<i64: 1, 128>}, {pipeline_mode = #tpu.pipeline_mode<synchronous>, transform_indices = @transform_3, window_bounds = array<i64: 128, 128>}, {pipeline_mode = #tpu.pipeline_mode<synchronous>, transform_indices = @transform_4, window_bounds = array<i64: 1, 128>}, {transform_indices = @transform_5, window_bounds = array<i64: 2, 128>}]} {
    %c0 = arith.constant 0 : index
    %c0_0 = arith.constant 0 : index
    %0 = vector.load %arg1[%c0, %c0_0] : memref<512x36xbf16, #tpu.memory_space<vmem>>, vector<512x36xbf16>
    %c0_1 = arith.constant 0 : index
    %c0_2 = arith.constant 0 : index
    %1 = vector.load %arg2[%c0_1, %c0_2] : memref<36x128xbf16, #tpu.memory_space<vmem>>, vector<36x128xbf16>
    %cst = arith.constant dense<0.000000e+00> : vector<512x128xf32>
    %2 = tpu.matmul %0, %1, %cst {dimension_numbers = #tpu.dot_dimension_numbers<[1], [0], [0], [1], [0, 0, 1, 1], [], []>} : vector<512x36xbf16>, vector<36x128xbf16>, vector<512x128xf32> -> vector<512x128xf32>
    %c0_3 = arith.constant 0 : index
    %c0_4 = arith.constant 0 : index
    %3 = vector.load %arg3[%c0_3, %c0_4] : memref<1x128xf32, #tpu.memory_space<vmem>>, vector<1x128xf32>
    %4 = vector.broadcast %3 : vector<1x128xf32> to vector<512x128xf32>
    %5 = arith.addf %2, %4 : vector<512x128xf32>
    %cst_5 = arith.constant 0.000000e+00 : f32
    %6 = vector.broadcast %cst_5 : f32 to vector<512x128xf32>
    %7 = arith.maximumf %5, %6 : vector<512x128xf32>
    %8 = vector.shape_cast %7 : vector<512x128xf32> to vector<2x256x128xf32>
    %cst_6 = arith.constant dense<0.000000e+00> : vector<2x128xf32>
    %9 = vector.multi_reduction <add>, %8, %cst_6 [1] : vector<2x256x128xf32> to vector<2x128xf32>
    %cst_7 = arith.constant 3.906250e-03 : f32
    %10 = vector.broadcast %cst_7 : f32 to vector<2x128xf32>
    %11 = arith.mulf %9, %10 : vector<2x128xf32>
    %12 = arith.truncf %11 : vector<2x128xf32> to vector<2x128xbf16>
    %c0_8 = arith.constant 0 : index
    %c0_9 = arith.constant 0 : index
    %13 = vector.load %arg4[%c0_8, %c0_9] : memref<128x128xbf16, #tpu.memory_space<vmem>>, vector<128x128xbf16>
    %cst_10 = arith.constant dense<0.000000e+00> : vector<2x128xf32>
    %14 = tpu.matmul %12, %13, %cst_10 {dimension_numbers = #tpu.dot_dimension_numbers<[1], [0], [0], [1], [0, 0, 1, 1], [], []>} : vector<2x128xbf16>, vector<128x128xbf16>, vector<2x128xf32> -> vector<2x128xf32>
    %c0_11 = arith.constant 0 : index
    %c0_12 = arith.constant 0 : index
    %15 = vector.load %arg5[%c0_11, %c0_12] : memref<1x128xf32, #tpu.memory_space<vmem>>, vector<1x128xf32>
    %16 = vector.broadcast %15 : vector<1x128xf32> to vector<2x128xf32>
    %17 = arith.addf %14, %16 : vector<2x128xf32>
    %c0_13 = arith.constant 0 : index
    %c0_14 = arith.constant 0 : index
    %18 = vector.load %arg6[%c0_13, %c0_14] : memref<2x128xf32, #tpu.memory_space<vmem>>, vector<2x128xf32>
    tpu.vector_store %arg6[%c0_13, %c0_14], %17 {strides = array<i32>} : memref<2x128xf32, #tpu.memory_space<vmem>>, vector<2x128xf32>,
    return
  }
  func.func @transform_0(%arg0: i32) -> (i32, i32) {
    %c0_i32 = arith.constant 0 : i32
    %c0_i32_0 = arith.constant 0 : i32
    return %arg0, %c0_i32 : i32, i32
  }
  func.func @transform_1(%arg0: i32) -> (i32, i32) {
    %c0_i32 = arith.constant 0 : i32
    %c0_i32_0 = arith.constant 0 : i32
    %c0_i32_1 = arith.constant 0 : i32
    return %c0_i32, %c0_i32_0 : i32, i32
  }
  func.func @transform_2(%arg0: i32) -> (i32, i32) {
    %c0_i32 = arith.constant 0 : i32
    %c0_i32_0 = arith.constant 0 : i32
    %c0_i32_1 = arith.constant 0 : i32
    return %c0_i32, %c0_i32_0 : i32, i32
  }
  func.func @transform_3(%arg0: i32) -> (i32, i32) {
    %c0_i32 = arith.constant 0 : i32
    %c0_i32_0 = arith.constant 0 : i32
    %c0_i32_1 = arith.constant 0 : i32
    return %c0_i32, %c0_i32_0 : i32, i32
  }
  func.func @transform_4(%arg0: i32) -> (i32, i32) {
    %c0_i32 = arith.constant 0 : i32
    %c0_i32_0 = arith.constant 0 : i32
    %c0_i32_1 = arith.constant 0 : i32
    return %c0_i32, %c0_i32_0 : i32, i32
  }
  func.func @transform_5(%arg0: i32) -> (i32, i32) {
    %c0_i32 = arith.constant 0 : i32
    %c0_i32_0 = arith.constant 0 : i32
    return %arg0, %c0_i32 : i32, i32
  }
}

</mosaic_0001>

<llo_original>
// kernel: tpu_custom_call.1
$region0: #{tpu_custom_call.1}
  #allocation0 [shape = 'u32[]', space=smem, size = 0x4, offset = 0x4, fixed_abs, tag = 'smem constant byte address 0x4 - core index']
  #allocation1 [shape = 'u32[72,128]{1,0:T(1,128)}', space=vmem, size = 0x9000, scoped, tag = 'internal scratch']
  %s0 = inlined_call_operand.vmem [shape: bf16[512,36], index: 0, kind: input, shape index: {}]
  %s1 = inlined_call_operand.vmem [shape: bf16[36,128], index: 1, kind: input, shape index: {}]
  %s2 = inlined_call_operand.vmem [shape: f32[1,128], index: 2, kind: input, shape index: {}]
  %s3 = inlined_call_operand.vmem [shape: bf16[128,128], index: 3, kind: input, shape index: {}]
  %s4 = inlined_call_operand.vmem [shape: f32[1,128], index: 4, kind: input, shape index: {}]
  %s5 = inlined_call_operand.hbm [shape: f32[2,128], index: 5, kind: output, shape index: {}]
  %s6 = sld [smem:[#allocation0]]
  $region30: #{tpu_custom_call.1} parent=0
    _
  %s8 = ssub.s32 1, %s6
  %s9 = scalar_select 0, %s8, %s6
  $region1: #{tpu_custom_call.1} parent=0
    #allocation2 [shape = 'u8[1024]{0}', space=vmem, size = 0x400, scoped, tag = 'output window, operand 0, single buffered']
    #allocation3 [shape = 's32[1]{0}', space=sflag, size = 0x4, scoped, tag = 'scoped memory for tpu_custom_call.1']
    %10 = vsyncpa [#allocation3], 0
    // Predicated region
    $region2: #{tpu_custom_call.1} parent=1 // pred_check
      _
    $region3: #{tpu_custom_call.1} parent=1 // pred_check_branch
      %12 = sbr.rel (0) target = $region5
    $region4: #{tpu_custom_call.1} parent=1 // pred_region
      _
    $region5: #{tpu_custom_call.1} parent=1 // pred_fallthru
      _
    // Predicated region
    $region6: #{tpu_custom_call.1} parent=1 // pred_check
      _
    $region7: #{tpu_custom_call.1} parent=1 // pred_check_branch
      %14 = sbr.rel (0) target = $region9
    $region8: #{tpu_custom_call.1} parent=1 // pred_region
      _
    $region9: #{tpu_custom_call.1} parent=1 // pred_fallthru
      _
    // Predicated region
    $region10: #{tpu_custom_call.1} parent=1 // pred_check
      _
    $region11: #{tpu_custom_call.1} parent=1 // pred_check_branch
      %16 = sbr.rel (0) target = $region13
    $region12: #{tpu_custom_call.1} parent=1 // pred_region
      _
    $region13: #{tpu_custom_call.1} parent=1 // pred_fallthru
      _
    // Predicated region
    $region14: #{tpu_custom_call.1} parent=1 // pred_check
      _
    $region15: #{tpu_custom_call.1} parent=1 // pred_check_branch
      %18 = sbr.rel (0) target = $region17
    $region16: #{tpu_custom_call.1} parent=1 // pred_region
      _
    $region17: #{tpu_custom_call.1} parent=1 // pred_fallthru
      _
    // Predicated region
    $region18: #{tpu_custom_call.1} parent=1 // pred_check
      _
    $region19: #{tpu_custom_call.1} parent=1 // pred_check_branch
      %20 = sbr.rel (0) target = $region21
    $region20: #{tpu_custom_call.1} parent=1 // pred_region
      _
    $region21: #{tpu_custom_call.1} parent=1 // pred_fallthru
      _
    %v22 = vld [vmem:[%s0] sm:$0xf]
    %v23 = vld [vmem:[%s0 + $0x4] sm:$0xf]
    %v24 = vld [vmem:[%s0 + $0x8] sm:$0xf]
    %v25 = vld [vmem:[%s0 + $0xc] sm:$0xf]
    %v26 = vld [vmem:[%s0 + $0x10] sm:$0xf]
    %v27 = vld [vmem:[%s0 + $0x14] sm:$0xf]
    %v28 = vld [vmem:[%s0 + $0x18] sm:$0xf]
    %v29 = vld [vmem:[%s0 + $0x1c] sm:$0xf]
    %v30 = vld [vmem:[%s0 + $0x20] sm:$0xf]
    %v31 = vld [vmem:[%s0 + $0x24] sm:$0xf]
    %v32 = vld [vmem:[%s0 + $0x28] sm:$0xf]
    %v33 = vld [vmem:[%s0 + $0x2c] sm:$0xf]
    %v34 = vld [vmem:[%s0 + $0x30] sm:$0xf]
    %v35 = vld [vmem:[%s0 + $0x34] sm:$0xf]
    %v36 = vld [vmem:[%s0 + $0x38] sm:$0xf]
    %v37 = vld [vmem:[%s0 + $0x3c] sm:$0xf]
    %v38 = vld [vmem:[%s0 + $0x40] sm:$0xf]
    %v39 = vld [vmem:[%s0 + $0x44] sm:$0xf]
    %v40 = vld [vmem:[%s0 + $0x48] sm:$0xf]
    %v41 = vld [vmem:[%s0 + $0x4c] sm:$0xf]
    %v42 = vld [vmem:[%s0 + $0x50] sm:$0xf]
    %v43 = vld [vmem:[%s0 + $0x54] sm:$0xf]
    %v44 = vld [vmem:[%s0 + $0x58] sm:$0xf]
    %v45 = vld [vmem:[%s0 + $0x5c] sm:$0xf]
    %v46 = vld [vmem:[%s0 + $0x60] sm:$0xf]
    %v47 = vld [vmem:[%s0 + $0x64] sm:$0xf]
    %v48 = vld [vmem:[%s0 + $0x68] sm:$0xf]
    %v49 = vld [vmem:[%s0 + $0x6c] sm:$0xf]
    %v50 = vld [vmem:[%s0 + $0x70] sm:$0xf]
    %v51 = vld [vmem:[%s0 + $0x74] sm:$0xf]
    %v52 = vld [vmem:[%s0 + $0x78] sm:$0xf]
    %v53 = vld [vmem:[%s0 + $0x7c] sm:$0xf]
    %v54 = vld [vmem:[%s0 + $0x80] sm:$0xf]
    %v55 = vld [vmem:[%s0 + $0x84] sm:$0xf]
    %v56 = vld [vmem:[%s0 + $0x88] sm:$0xf]
    %v57 = vld [vmem:[%s0 + $0x8c] sm:$0xf]
    %v58 = vld [vmem:[%s0 + $0x90] sm:$0xf]
    %v59 = vld [vmem:[%s0 + $0x94] sm:$0xf]
    %v60 = vld [vmem:[%s0 + $0x98] sm:$0xf]
    %v61 = vld [vmem:[%s0 + $0x9c] sm:$0xf]
    %v62 = vld [vmem:[%s0 + $0xa0] sm:$0xf]
    %v63 = vld [vmem:[%s0 + $0xa4] sm:$0xf]
    %v64 = vld [vmem:[%s0 + $0xa8] sm:$0xf]
    %v65 = vld [vmem:[%s0 + $0xac] sm:$0xf]
    %v66 = vld [vmem:[%s0 + $0xb0] sm:$0xf]
    %v67 = vld [vmem:[%s0 + $0xb4] sm:$0xf]
    %v68 = vld [vmem:[%s0 + $0xb8] sm:$0xf]
    %v69 = vld [vmem:[%s0 + $0xbc] sm:$0xf]
    %v70 = vld [vmem:[%s0 + $0xc0] sm:$0xf]
    %v71 = vld [vmem:[%s0 + $0xc4] sm:$0xf]
    %v72 = vld [vmem:[%s0 + $0xc8] sm:$0xf]
    %v73 = vld [vmem:[%s0 + $0xcc] sm:$0xf]
    %v74 = vld [vmem:[%s0 + $0xd0] sm:$0xf]
    %v75 = vld [vmem:[%s0 + $0xd4] sm:$0xf]
    %v76 = vld [vmem:[%s0 + $0xd8] sm:$0xf]
    %v77 = vld [vmem:[%s0 + $0xdc] sm:$0xf]
    %v78 = vld [vmem:[%s0 + $0xe0] sm:$0xf]
    %v79 = vld [vmem:[%s0 + $0xe4] sm:$0xf]
    %v80 = vld [vmem:[%s0 + $0xe8] sm:$0xf]
    %v81 = vld [vmem:[%s0 + $0xec] sm:$0xf]
    %v82 = vld [vmem:[%s0 + $0xf0] sm:$0xf]
    %v83 = vld [vmem:[%s0 + $0xf4] sm:$0xf]
    %v84 = vld [vmem:[%s0 + $0xf8] sm:$0xf]
    %v85 = vld [vmem:[%s0 + $0xfc] sm:$0xf]
    %v86 = vld [vmem:[%s1] sm:$0xf]
    %v87 = vld [vmem:[%s1 + $0x4] sm:$0xf]
    %v88 = vld [vmem:[%s1 + $0x8] sm:$0xf]
    %v89 = vld [vmem:[%s1 + $0xc] sm:$0xf]
    %v90 = vld [vmem:[%s1 + $0x10] sm:$0x3]
    %v91 = vld [vmem:[%s2] sm:$0x1]
    %v93 = vperm.slane %v91, 0
    %v159 = vunpack.c.l.b16 %v22
    %v160 = vunpack.c.l.b16 %v23
    %v161 = vunpack.c.l.b16 %v24
    %v162 = vunpack.c.l.b16 %v25
    %v163 = vunpack.c.l.b16 %v26
    %v164 = vunpack.c.l.b16 %v27
    %v165 = vunpack.c.l.b16 %v28
    %v166 = vunpack.c.l.b16 %v29
    %v167 = vunpack.c.l.b16 %v30
    %v168 = vunpack.c.l.b16 %v31
    %v169 = vunpack.c.l.b16 %v32
    %v170 = vunpack.c.l.b16 %v33
    %v171 = vunpack.c.l.b16 %v34
    %v172 = vunpack.c.l.b16 %v35
    %v173 = vunpack.c.l.b16 %v36
    %v174 = vunpack.c.l.b16 %v37
    %v175 = vunpack.c.l.b16 %v38
    %v176 = vunpack.c.l.b16 %v39
    %v177 = vunpack.c.l.b16 %v40
    %v178 = vunpack.c.l.b16 %v41
    %v179 = vunpack.c.l.b16 %v42
    %v180 = vunpack.c.l.b16 %v43
    %v181 = vunpack.c.l.b16 %v44
    %v182 = vunpack.c.l.b16 %v45
    %v183 = vunpack.c.l.b16 %v46
    %v184 = vunpack.c.l.b16 %v47
    %v185 = vunpack.c.l.b16 %v48
    %v186 = vunpack.c.l.b16 %v49
    %v187 = vunpack.c.l.b16 %v50
    %v188 = vunpack.c.l.b16 %v51
    %v189 = vunpack.c.l.b16 %v52
    %v190 = vunpack.c.l.b16 %v53
    %v191 = vunpack.c.l.b16 %v54
    %v192 = vunpack.c.l.b16 %v55
    %v193 = vunpack.c.l.b16 %v56
    %v194 = vunpack.c.l.b16 %v57
    %v195 = vunpack.c.l.b16 %v58
    %v196 = vunpack.c.l.b16 %v59
    %v197 = vunpack.c.l.b16 %v60
    %v198 = vunpack.c.l.b16 %v61
    %v199 = vunpack.c.l.b16 %v62
    %v200 = vunpack.c.l.b16 %v63
    %v201 = vunpack.c.l.b16 %v64
    %v202 = vunpack.c.l.b16 %v65
    %v203 = vunpack.c.l.b16 %v66
    %v204 = vunpack.c.l.b16 %v67
    %v205 = vunpack.c.l.b16 %v68
    %v206 = vunpack.c.l.b16 %v69
    %v207 = vunpack.c.l.b16 %v70
    %v208 = vunpack.c.l.b16 %v71
    %v209 = vunpack.c.l.b16 %v72
    %v210 = vunpack.c.l.b16 %v73
    %v211 = vunpack.c.l.b16 %v74
    %v212 = vunpack.c.l.b16 %v75
    %v213 = vunpack.c.l.b16 %v76
    %v214 = vunpack.c.l.b16 %v77
    %v215 = vunpack.c.l.b16 %v78
    %v216 = vunpack.c.l.b16 %v79
    %v217 = vunpack.c.l.b16 %v80
    %v218 = vunpack.c.l.b16 %v81
    %v219 = vunpack.c.l.b16 %v82
    %v220 = vunpack.c.l.b16 %v83
    %v221 = vunpack.c.l.b16 %v84
    %v222 = vunpack.c.l.b16 %v85
    %v223 = vpack.c.b16 %v160, %v159
    %v224 = vpack.c.b16 %v162, %v161
    %v225 = vpack.c.b16 %v164, %v163
    %v226 = vpack.c.b16 %v166, %v165
    %v227 = vpack.c.b16 %v168, %v167
    %v228 = vpack.c.b16 %v170, %v169
    %v229 = vpack.c.b16 %v172, %v171
    %v230 = vpack.c.b16 %v174, %v173
    %v231 = vpack.c.b16 %v176, %v175
    %v232 = vpack.c.b16 %v178, %v177
    %v233 = vpack.c.b16 %v180, %v179
    %v234 = vpack.c.b16 %v182, %v181
    %v235 = vpack.c.b16 %v184, %v183
    %v236 = vpack.c.b16 %v186, %v185
    %v237 = vpack.c.b16 %v188, %v187
    %v238 = vpack.c.b16 %v190, %v189
    %v239 = vpack.c.b16 %v192, %v191
    %v240 = vpack.c.b16 %v194, %v193
    %v241 = vpack.c.b16 %v196, %v195
    %v242 = vpack.c.b16 %v198, %v197
    %v243 = vpack.c.b16 %v200, %v199
    %v244 = vpack.c.b16 %v202, %v201
    %v245 = vpack.c.b16 %v204, %v203
    %v246 = vpack.c.b16 %v206, %v205
    %v247 = vpack.c.b16 %v208, %v207
    %v248 = vpack.c.b16 %v210, %v209
    %v249 = vpack.c.b16 %v212, %v211
    %v250 = vpack.c.b16 %v214, %v213
    %v251 = vpack.c.b16 %v216, %v215
    %v252 = vpack.c.b16 %v218, %v217
    %v253 = vpack.c.b16 %v220, %v219
    %v254 = vpack.c.b16 %v222, %v221
    %v260 = vunpack.c.l.b16 %v86
    %v261 = vunpack.c.l.b16 %v87
    %v262 = vunpack.c.l.b16 %v88
    %v263 = vunpack.c.l.b16 %v89
    %v264 = vunpack.c.l.b16 %v90
    %v265 = vpack.c.b16 %v261, %v260
    %v266 = vpack.c.b16 %v263, %v262
    %v267 = vpack.c.b16 %v264, %v264
    %vm270 = vcmask 293888
    %v272 = vsel %vm270, %v223, 0
    %v275 = vsel %vm270, %v224, 0
    %v278 = vsel %vm270, %v225, 0
    %v281 = vsel %vm270, %v226, 0
    %v284 = vsel %vm270, %v227, 0
    %v287 = vsel %vm270, %v228, 0
    %v290 = vsel %vm270, %v229, 0
    %v293 = vsel %vm270, %v230, 0
    %v296 = vsel %vm270, %v231, 0
    %v299 = vsel %vm270, %v232, 0
    %v302 = vsel %vm270, %v233, 0
    %v305 = vsel %vm270, %v234, 0
    %v308 = vsel %vm270, %v235, 0
    %v311 = vsel %vm270, %v236, 0
    %v314 = vsel %vm270, %v237, 0
    %v317 = vsel %vm270, %v238, 0
    %v320 = vsel %vm270, %v239, 0
    %v323 = vsel %vm270, %v240, 0
    %v326 = vsel %vm270, %v241, 0
    %v329 = vsel %vm270, %v242, 0
    %v332 = vsel %vm270, %v243, 0
    %v335 = vsel %vm270, %v244, 0
    %v338 = vsel %vm270, %v245, 0
    %v341 = vsel %vm270, %v246, 0
    %v344 = vsel %vm270, %v247, 0
    %v347 = vsel %vm270, %v248, 0
    %v350 = vsel %vm270, %v249, 0
    %v353 = vsel %vm270, %v250, 0
    %v356 = vsel %vm270, %v251, 0
    %v359 = vsel %vm270, %v252, 0
    %v362 = vsel %vm270, %v253, 0
    %v365 = vsel %vm270, %v254, 0
    %vm367 = vcmask 1041408
    %v369 = vsel %vm367, %v267, 0
    %371 = vmatpush.bf16.msra.mxu0 0
    %372 = vmatpush.bf16.msra.mxu0 0
    %373 = vmatpush.bf16.msra.mxu0 0
    %374 = vmatpush.bf16.msra.mxu0 0
    %375 = vmatpush.bf16.msra.mxu0 0
    %376 = vmatpush.bf16.msra.mxu0 %v369
    %377 = vmatpush.bf16.msra.mxu0 %v266
    %378 = vmatpush.bf16.msra.mxu0 %v265
    %379 = vmatmul.bf16.gmra.mxu0 %v272
    %v380 = vpop.f32.mrf.mxu0
    %v381 = vadd.f32 %v93, %v380
    %v382 = vpop.f32.mrf.mxu0
    %v383 = vadd.f32 %v93, %v382
    %384 = vmatmul.bf16.gmra.mxu0 %v275
    %v385 = vpop.f32.mrf.mxu0
    %v386 = vadd.f32 %v93, %v385
    %v387 = vpop.f32.mrf.mxu0
    %v388 = vadd.f32 %v93, %v387
    %389 = vmatmul.bf16.gmra.mxu0 %v278
    %v390 = vpop.f32.mrf.mxu0
    %v391 = vadd.f32 %v93, %v390
    %v392 = vpop.f32.mrf.mxu0
    %v393 = vadd.f32 %v93, %v392
    %394 = vmatmul.bf16.gmra.mxu0 %v281
    %v395 = vpop.f32.mrf.mxu0
    %v396 = vadd.f32 %v93, %v395
    %v397 = vpop.f32.mrf.mxu0
    %v398 = vadd.f32 %v93, %v397
    %399 = vmatmul.bf16.gmra.mxu0 %v284
    %v400 = vpop.f32.mrf.mxu0
    %v401 = vadd.f32 %v93, %v400
    %v402 = vpop.f32.mrf.mxu0
    %v403 = vadd.f32 %v93, %v402
    %404 = vmatmul.bf16.gmra.mxu0 %v287
    %v405 = vpop.f32.mrf.mxu0
    %v406 = vadd.f32 %v93, %v405
    %v407 = vpop.f32.mrf.mxu0
    %v408 = vadd.f32 %v93, %v407
    %409 = vmatmul.bf16.gmra.mxu0 %v290
    %v410 = vpop.f32.mrf.mxu0
    %v411 = vadd.f32 %v93, %v410
    %v412 = vpop.f32.mrf.mxu0
    %v413 = vadd.f32 %v93, %v412
    %414 = vmatmul.bf16.gmra.mxu0 %v293
    %v415 = vpop.f32.mrf.mxu0
    %v416 = vadd.f32 %v93, %v415
    %v417 = vpop.f32.mrf.mxu0
    %v418 = vadd.f32 %v93, %v417
    %419 = vmatmul.bf16.gmra.mxu0 %v296
    %v420 = vpop.f32.mrf.mxu0
    %v421 = vadd.f32 %v93, %v420
    %v422 = vpop.f32.mrf.mxu0
    %v423 = vadd.f32 %v93, %v422
    %424 = vmatmul.bf16.gmra.mxu0 %v299
    %v425 = vpop.f32.mrf.mxu0
    %v426 = vadd.f32 %v93, %v425
    %v427 = vpop.f32.mrf.mxu0
    %v428 = vadd.f32 %v93, %v427
    %429 = vmatmul.bf16.gmra.mxu0 %v302
    %v430 = vpop.f32.mrf.mxu0
    %v431 = vadd.f32 %v93, %v430
    %v432 = vpop.f32.mrf.mxu0
    %v433 = vadd.f32 %v93, %v432
    %434 = vmatmul.bf16.gmra.mxu0 %v305
    %v435 = vpop.f32.mrf.mxu0
    %v436 = vadd.f32 %v93, %v435
    %v437 = vpop.f32.mrf.mxu0
    %v438 = vadd.f32 %v93, %v437
    %439 = vmatmul.bf16.gmra.mxu0 %v308
    %v440 = vpop.f32.mrf.mxu0
    %v441 = vadd.f32 %v93, %v440
    %v442 = vpop.f32.mrf.mxu0
    %v443 = vadd.f32 %v93, %v442
    %444 = vmatmul.bf16.gmra.mxu0 %v311
    %v445 = vpop.f32.mrf.mxu0
    %v446 = vadd.f32 %v93, %v445
    %v447 = vpop.f32.mrf.mxu0
    %v448 = vadd.f32 %v93, %v447
    %449 = vmatmul.bf16.gmra.mxu0 %v314
    %v450 = vpop.f32.mrf.mxu0
    %v451 = vadd.f32 %v93, %v450
    %v452 = vpop.f32.mrf.mxu0
    %v453 = vadd.f32 %v93, %v452
    %454 = vmatmul.bf16.gmra.mxu0 %v317
    %v455 = vpop.f32.mrf.mxu0
    %v456 = vadd.f32 %v93, %v455
    %v457 = vpop.f32.mrf.mxu0
    %v458 = vadd.f32 %v93, %v457
    %459 = vmatmul.bf16.gmra.mxu0 %v320
    %v460 = vpop.f32.mrf.mxu0
    %v461 = vadd.f32 %v93, %v460
    %v462 = vpop.f32.mrf.mxu0
    %v463 = vadd.f32 %v93, %v462
    %464 = vmatmul.bf16.gmra.mxu0 %v323
    %v465 = vpop.f32.mrf.mxu0
    %v466 = vadd.f32 %v93, %v465
    %v467 = vpop.f32.mrf.mxu0
    %v468 = vadd.f32 %v93, %v467
    %469 = vmatmul.bf16.gmra.mxu0 %v326
    %v470 = vpop.f32.mrf.mxu0
    %v471 = vadd.f32 %v93, %v470
    %v472 = vpop.f32.mrf.mxu0
    %v473 = vadd.f32 %v93, %v472
    %474 = vmatmul.bf16.gmra.mxu0 %v329
    %v475 = vpop.f32.mrf.mxu0
    %v476 = vadd.f32 %v93, %v475
    %v477 = vpop.f32.mrf.mxu0
    %v478 = vadd.f32 %v93, %v477
    %479 = vmatmul.bf16.gmra.mxu0 %v332
    %v480 = vpop.f32.mrf.mxu0
    %v481 = vadd.f32 %v93, %v480
    %v482 = vpop.f32.mrf.mxu0
    %v483 = vadd.f32 %v93, %v482
    %484 = vmatmul.bf16.gmra.mxu0 %v335
    %v485 = vpop.f32.mrf.mxu0
    %v486 = vadd.f32 %v93, %v485
    %v487 = vpop.f32.mrf.mxu0
    %v488 = vadd.f32 %v93, %v487
    %489 = vmatmul.bf16.gmra.mxu0 %v338
    %v490 = vpop.f32.mrf.mxu0
    %v491 = vadd.f32 %v93, %v490
    %v492 = vpop.f32.mrf.mxu0
    %v493 = vadd.f32 %v93, %v492
    %494 = vmatmul.bf16.gmra.mxu0 %v341
    %v495 = vpop.f32.mrf.mxu0
    %v496 = vadd.f32 %v93, %v495
    %v497 = vpop.f32.mrf.mxu0
    %v498 = vadd.f32 %v93, %v497
    %499 = vmatmul.bf16.gmra.mxu0 %v344
    %v500 = vpop.f32.mrf.mxu0
    %v501 = vadd.f32 %v93, %v500
    %v502 = vpop.f32.mrf.mxu0
    %v503 = vadd.f32 %v93, %v502
    %504 = vmatmul.bf16.gmra.mxu0 %v347
    %v505 = vpop.f32.mrf.mxu0
    %v506 = vadd.f32 %v93, %v505
    %v507 = vpop.f32.mrf.mxu0
    %v508 = vadd.f32 %v93, %v507
    %509 = vmatmul.bf16.gmra.mxu0 %v350
    %v510 = vpop.f32.mrf.mxu0
    %v511 = vadd.f32 %v93, %v510
    %v512 = vpop.f32.mrf.mxu0
    %v513 = vadd.f32 %v93, %v512
    %514 = vmatmul.bf16.gmra.mxu0 %v353
    %v515 = vpop.f32.mrf.mxu0
    %v516 = vadd.f32 %v93, %v515
    %v517 = vpop.f32.mrf.mxu0
    %v518 = vadd.f32 %v93, %v517
    %519 = vmatmul.bf16.gmra.mxu0 %v356
    %v520 = vpop.f32.mrf.mxu0
    %v521 = vadd.f32 %v93, %v520
    %v522 = vpop.f32.mrf.mxu0
    %v523 = vadd.f32 %v93, %v522
    %524 = vmatmul.bf16.gmra.mxu0 %v359
    %v525 = vpop.f32.mrf.mxu0
    %v526 = vadd.f32 %v93, %v525
    %v527 = vpop.f32.mrf.mxu0
    %v528 = vadd.f32 %v93, %v527
    %529 = vmatmul.bf16.gmra.mxu0 %v362
    %v530 = vpop.f32.mrf.mxu0
    %v531 = vadd.f32 %v93, %v530
    %v532 = vpop.f32.mrf.mxu0
    %v533 = vadd.f32 %v93, %v532
    %534 = vmatmul.bf16.gmra.mxu0 %v365
    %v535 = vpop.f32.mrf.mxu0
    %v536 = vadd.f32 %v93, %v535
    %v537 = vpop.f32.mrf.mxu0
    %v538 = vadd.f32 %v93, %v537
    %539 = vdwg.mxu0
    %v540 = vmax.f32 %v381, 0.0
    %v541 = vmax.f32 %v383, 0.0
    %v542 = vmax.f32 %v386, 0.0
    %v543 = vmax.f32 %v388, 0.0
    %v544 = vmax.f32 %v391, 0.0
    %v545 = vmax.f32 %v393, 0.0
    %v546 = vmax.f32 %v396, 0.0
    %v547 = vmax.f32 %v398, 0.0
    %v548 = vmax.f32 %v401, 0.0
    %v549 = vmax.f32 %v403, 0.0
    %v550 = vmax.f32 %v406, 0.0
    %v551 = vmax.f32 %v408, 0.0
    %v552 = vmax.f32 %v411, 0.0
    %v553 = vmax.f32 %v413, 0.0
    %v554 = vmax.f32 %v416, 0.0
    %v555 = vmax.f32 %v418, 0.0
    %v556 = vmax.f32 %v421, 0.0
    %v557 = vmax.f32 %v423, 0.0
    %v558 = vmax.f32 %v426, 0.0
    %v559 = vmax.f32 %v428, 0.0
    %v560 = vmax.f32 %v431, 0.0
    %v561 = vmax.f32 %v433, 0.0
    %v562 = vmax.f32 %v436, 0.0
    %v563 = vmax.f32 %v438, 0.0
    %v564 = vmax.f32 %v441, 0.0
    %v565 = vmax.f32 %v443, 0.0
    %v566 = vmax.f32 %v446, 0.0
    %v567 = vmax.f32 %v448, 0.0
    %v568 = vmax.f32 %v451, 0.0
    %v569 = vmax.f32 %v453, 0.0
    %v570 = vmax.f32 %v456, 0.0
    %v571 = vmax.f32 %v458, 0.0
    %v572 = vmax.f32 %v461, 0.0
    %v573 = vmax.f32 %v463, 0.0
    %v574 = vmax.f32 %v466, 0.0
    %v575 = vmax.f32 %v468, 0.0
    %v576 = vmax.f32 %v471, 0.0
    %v577 = vmax.f32 %v473, 0.0
    %v578 = vmax.f32 %v476, 0.0
    %v579 = vmax.f32 %v478, 0.0
    %v580 = vmax.f32 %v481, 0.0
    %v581 = vmax.f32 %v483, 0.0
    %v582 = vmax.f32 %v486, 0.0
    %v583 = vmax.f32 %v488, 0.0
    %v584 = vmax.f32 %v491, 0.0
    %v585 = vmax.f32 %v493, 0.0
    %v586 = vmax.f32 %v496, 0.0
    %v587 = vmax.f32 %v498, 0.0
    %v588 = vmax.f32 %v501, 0.0
    %v589 = vmax.f32 %v503, 0.0
    %v590 = vmax.f32 %v506, 0.0
    %v591 = vmax.f32 %v508, 0.0
    %v592 = vmax.f32 %v511, 0.0
    %v593 = vmax.f32 %v513, 0.0
    %v594 = vmax.f32 %v516, 0.0
    %v595 = vmax.f32 %v518, 0.0
    %v596 = vmax.f32 %v521, 0.0
    %v597 = vmax.f32 %v523, 0.0
    %v598 = vmax.f32 %v526, 0.0
    %v599 = vmax.f32 %v528, 0.0
    %v600 = vmax.f32 %v531, 0.0
    %v601 = vmax.f32 %v533, 0.0
    %v602 = vmax.f32 %v536, 0.0
    %v603 = vmax.f32 %v538, 0.0
    %v604 = vadd.f32 %v540, %v541
    %v605 = vadd.f32 %v604, %v542
    %v606 = vadd.f32 %v605, %v543
    %v607 = vadd.f32 %v606, %v544
    %v608 = vadd.f32 %v607, %v545
    %v609 = vadd.f32 %v608, %v546
    %v610 = vadd.f32 %v609, %v547
    %v611 = vadd.f32 %v610, %v548
    %v612 = vadd.f32 %v611, %v549
    %v613 = vadd.f32 %v612, %v550
    %v614 = vadd.f32 %v613, %v551
    %v615 = vadd.f32 %v614, %v552
    %v616 = vadd.f32 %v615, %v553
    %v617 = vadd.f32 %v616, %v554
    %v618 = vadd.f32 %v617, %v555
    %v619 = vadd.f32 %v618, %v556
    %v620 = vadd.f32 %v619, %v557
    %v621 = vadd.f32 %v620, %v558
    %v622 = vadd.f32 %v621, %v559
    %v623 = vadd.f32 %v622, %v560
    %v624 = vadd.f32 %v623, %v561
    %v625 = vadd.f32 %v624, %v562
    %v626 = vadd.f32 %v625, %v563
    %v627 = vadd.f32 %v626, %v564
    %v628 = vadd.f32 %v627, %v565
    %v629 = vadd.f32 %v628, %v566
    %v630 = vadd.f32 %v629, %v567
    %v631 = vadd.f32 %v630, %v568
    %v632 = vadd.f32 %v631, %v569
    %v633 = vadd.f32 %v632, %v570
    %v634 = vadd.f32 %v633, %v571
    %v635 = vrot.slane %v634, 4
    %v636 = vadd.f32 %v634, %v635
    %v637 = vrot.slane %v636, 2
    %v638 = vadd.f32 %v636, %v637
    %v639 = vrot.slane %v638, 1
    %v640 = vadd.f32 %v638, %v639
    %v641 = vadd.f32 %v572, %v573
    %v642 = vadd.f32 %v641, %v574
    %v643 = vadd.f32 %v642, %v575
    %v644 = vadd.f32 %v643, %v576
    %v645 = vadd.f32 %v644, %v577
    %v646 = vadd.f32 %v645, %v578
    %v647 = vadd.f32 %v646, %v579
    %v648 = vadd.f32 %v647, %v580
    %v649 = vadd.f32 %v648, %v581
    %v650 = vadd.f32 %v649, %v582
    %v651 = vadd.f32 %v650, %v583
    %v652 = vadd.f32 %v651, %v584
    %v653 = vadd.f32 %v652, %v585
    %v654 = vadd.f32 %v653, %v586
    %v655 = vadd.f32 %v654, %v587
    %v656 = vadd.f32 %v655, %v588
    %v657 = vadd.f32 %v656, %v589
    %v658 = vadd.f32 %v657, %v590
    %v659 = vadd.f32 %v658, %v591
    %v660 = vadd.f32 %v659, %v592
    %v661 = vadd.f32 %v660, %v593
    %v662 = vadd.f32 %v661, %v594
    %v663 = vadd.f32 %v662, %v595
    %v664 = vadd.f32 %v663, %v596
    %v665 = vadd.f32 %v664, %v597
    %v666 = vadd.f32 %v665, %v598
    %v667 = vadd.f32 %v666, %v599
    %v668 = vadd.f32 %v667, %v600
    %v669 = vadd.f32 %v668, %v601
    %v670 = vadd.f32 %v669, %v602
    %v671 = vadd.f32 %v670, %v603
    %v672 = vrot.slane %v671, 4
    %v673 = vadd.f32 %v671, %v672
    %v674 = vrot.slane %v673, 2
    %v675 = vadd.f32 %v673, %v674
    %v676 = vrot.slane %v675, 1
    %v677 = vadd.f32 %v675, %v676
    %v678 = vmul.f32 %v640, 0.00390625
    %v679 = vmul.f32 %v677, 0.00390625
    %v680 = vpack.c.bf16 %v678, %v678
    %v681 = vpack.c.bf16 %v679, %v679
    %v682 = vld [vmem:[%s3] sm:$0xf]
    %v683 = vld [vmem:[%s3 + $0x4] sm:$0xf]
    %v684 = vld [vmem:[%s3 + $0x8] sm:$0xf]
    %v685 = vld [vmem:[%s3 + $0xc] sm:$0xf]
    %v686 = vld [vmem:[%s3 + $0x10] sm:$0xf]
    %v687 = vld [vmem:[%s3 + $0x14] sm:$0xf]
    %v688 = vld [vmem:[%s3 + $0x18] sm:$0xf]
    %v689 = vld [vmem:[%s3 + $0x1c] sm:$0xf]
    %v690 = vld [vmem:[%s3 + $0x20] sm:$0xf]
    %v691 = vld [vmem:[%s3 + $0x24] sm:$0xf]
    %v692 = vld [vmem:[%s3 + $0x28] sm:$0xf]
    %v693 = vld [vmem:[%s3 + $0x2c] sm:$0xf]
    %v694 = vld [vmem:[%s3 + $0x30] sm:$0xf]
    %v695 = vld [vmem:[%s3 + $0x34] sm:$0xf]
    %v696 = vld [vmem:[%s3 + $0x38] sm:$0xf]
    %v697 = vld [vmem:[%s3 + $0x3c] sm:$0xf]
    %v698 = vld [vmem:[%s4] sm:$0x1]
    %v700 = vperm.slane %v698, 0
    %v704 = vunpack.c.l.b16 %v680
    %v705 = vunpack.c.l.b16 %v681
    %vm706 = vcmask 1041409
    %v707 = vsel %vm706, %v705, %v704
    %v708 = vpack.c.b16 %v707, %v707
    %v726 = vunpack.c.l.b16 %v682
    %v727 = vunpack.c.l.b16 %v683
    %v728 = vunpack.c.l.b16 %v684
    %v729 = vunpack.c.l.b16 %v685
    %v730 = vunpack.c.l.b16 %v686
    %v731 = vunpack.c.l.b16 %v687
    %v732 = vunpack.c.l.b16 %v688
    %v733 = vunpack.c.l.b16 %v689
    %v734 = vunpack.c.l.b16 %v690
    %v735 = vunpack.c.l.b16 %v691
    %v736 = vunpack.c.l.b16 %v692
    %v737 = vunpack.c.l.b16 %v693
    %v738 = vunpack.c.l.b16 %v694
    %v739 = vunpack.c.l.b16 %v695
    %v740 = vunpack.c.l.b16 %v696
    %v741 = vunpack.c.l.b16 %v697
    %v742 = vpack.c.b16 %v727, %v726
    %v743 = vpack.c.b16 %v729, %v728
    %v744 = vpack.c.b16 %v731, %v730
    %v745 = vpack.c.b16 %v733, %v732
    %v746 = vpack.c.b16 %v735, %v734
    %v747 = vpack.c.b16 %v737, %v736
    %v748 = vpack.c.b16 %v739, %v738
    %v749 = vpack.c.b16 %v741, %v740
    %758 = vmatpush.bf16.msra.mxu0 %v749
    %759 = vmatpush.bf16.msra.mxu0 %v748
    %760 = vmatpush.bf16.msra.mxu0 %v747
    %761 = vmatpush.bf16.msra.mxu0 %v746
    %762 = vmatpush.bf16.msra.mxu0 %v745
    %763 = vmatpush.bf16.msra.mxu0 %v744
    %764 = vmatpush.bf16.msra.mxu0 %v743
    %765 = vmatpush.bf16.msra.mxu0 %v742
    %766 = vmatmul.bf16.gmra.mxu0 %v708
    %v767 = vpop.f32.mrf.mxu0
    %v768 = vadd.f32 %v700, %v767
    %v769 = vpop.f32.mrf.mxu0
    %770 = vdwg.mxu0
    %771 = vst [vmem:[#allocation2] sm:$0x3] %v768
    // Predicated region
    $region22: #{tpu_custom_call.1} parent=1 // pred_check
      _
    $region23: #{tpu_custom_call.1} parent=1 // pred_check_branch
      %773 = sbr.rel (0) target = $region25
    $region24: #{tpu_custom_call.1} parent=1 // pred_region
      %775 = vsyncadd [#allocation3], 0
      %s777 = sshll.u32 [#allocation2], 4
      %s778 = int_to_ptr.vmem [resolvable:$true] %s777
      %s779 = sshll.u32 %s5, 4
      %s780 = int_to_ptr.hbm [resolvable:$true] %s779
      %782 = dma.vmem_to_hbm [thread:$0]  %s778, 32, %s780, [#allocation3]
    $region25: #{tpu_custom_call.1} parent=1 // pred_fallthru
      _
    // Predicated region
    $region26: #{tpu_custom_call.1} parent=1 // pred_check
      _
    $region27: #{tpu_custom_call.1} parent=1 // pred_check_branch
      %784 = sbr.rel (0) target = $region29
    $region28: #{tpu_custom_call.1} parent=1 // pred_region
      %786 = dma.done [#allocation3], 32
    $region29: #{tpu_custom_call.1} parent=1 // pred_fallthru
      _
    %787 = vsyncpa [#allocation3], 1

</llo_original>
